<compile_context>
chip_gen: v7x
topology: tpu7x:2x2x1
jax: 0.10.0
libtpu: 0.0.40
codegen_flags: <defaults>
</compile_context>

<pallas_src>
import jax
import jax.numpy as jnp
from jax.experimental import pallas as pl
from jax.experimental.pallas import tpu as pltpu

FEAT_PAD = 128                    # lane-padded feature width for all layers
PARAM_ROWS = 3 * FEAT_PAD + 8     # 392 sublanes: 3 weight blocks + bias block


def qnetwork_kernel(x_ref, p_ref, out_ref):
    # x_ref: (TM, 128)  -- features 0..10 live in lanes 0..10, rest zero
    x = x_ref[...]

    # Static, (8,128)-aligned views into the packed parameter slab (free).
    w1 = p_ref[pl.ds(0, FEAT_PAD), :]            # (128, 128)
    w2 = p_ref[pl.ds(FEAT_PAD, FEAT_PAD), :]     # (128, 128)
    w3 = p_ref[pl.ds(2 * FEAT_PAD, FEAT_PAD), :] # (128, 128)
    bias = p_ref[pl.ds(3 * FEAT_PAD, 8), :]      # (8, 128)
    b1 = bias[0:1, :]                            # (1, 128)
    b2 = bias[1:2, :]
    b3 = bias[2:3, :]

    # Layer 1: Linear(11,64) + ReLU   (zero-padded to 128x128)
    h1 = jnp.dot(x, w1, preferred_element_type=jnp.float32) + b1
    h1 = jnp.maximum(h1, 0.0)

    # Layer 2: Linear(64,64) + ReLU
    h2 = jnp.dot(h1, w2, preferred_element_type=jnp.float32) + b2
    h2 = jnp.maximum(h2, 0.0)

    # Layer 3: Linear(64,3) -- written into a lane-dense 128-wide output tile
    out = jnp.dot(h2, w3, preferred_element_type=jnp.float32) + b3
    out_ref[...] = out.astype(out_ref.dtype)


def _qnetwork_padded(x_pad, slab, tm):
    """x_pad: (M_pad, 128) with M_pad % tm == 0. Returns (M_pad, 128)."""
    m_pad = x_pad.shape[0]
    return pl.pallas_call(
        qnetwork_kernel,
        out_shape=jax.ShapeDtypeStruct((m_pad, FEAT_PAD), jnp.float32),
        grid_spec=pltpu.PrefetchScalarGridSpec(
            num_scalar_prefetch=0,
            grid=(m_pad // tm,),
            in_specs=[
                pl.BlockSpec((tm, FEAT_PAD), lambda i: (i, 0)),
                # Constant index_map: weight slab DMA'd once, stays VMEM-resident.
                pl.BlockSpec((PARAM_ROWS, FEAT_PAD), lambda i: (0, 0)),
            ],
            out_specs=pl.BlockSpec((tm, FEAT_PAD), lambda i: (i, 0)),
        ),
        compiler_params=pltpu.CompilerParams(
            dimension_semantics=("parallel",),
        ),
    )(x_pad, slab)


def qnetwork_forward_batched(x, slab, block_m=128):
    """x: (M, 11) (or anything reshapeable to that). Returns (M, 3)."""
    x = jnp.asarray(x, jnp.float32).reshape(-1, 11)
    m = x.shape[0]
    # 128-row tiles when there is real batch; 8-row (sublane-fill) tile otherwise.
    tm = block_m if m >= block_m else 8
    m_pad = int(pl.cdiv(m, tm)) * tm
    x_pad = jnp.zeros((m_pad, FEAT_PAD), jnp.float32).at[:m, :11].set(x)
    out_pad = _qnetwork_padded(x_pad, slab, tm)
    return out_pad[:m, :3]


def qnetwork_forward(x, slab):
    """Mirrors the PyTorch module: forward(x) = network(x.view(1, 11)) -> (1, 3)."""
    return qnetwork_forward_batched(jnp.reshape(x, (1, 11)), slab)


def init_params(key):
    """Deterministic synthetic parameters (PyTorch nn.Linear-style uniform init)."""
    def linear(key, fan_in, fan_out):
        k_w, k_b = jax.random.split(key)
        bound = 1.0 / jnp.sqrt(jnp.float32(fan_in))
        # Generate in PyTorch layout (out, in), then transpose to (in, out).
        w_pt = jax.random.uniform(k_w, (fan_out, fan_in), jnp.float32, -bound, bound)
        b = jax.random.uniform(k_b, (fan_out,), jnp.float32, -bound, bound)
        return w_pt.T, b

    k1, k2, k3 = jax.random.split(key, 3)
    w1, b1 = linear(k1, 11, 64)
    w2, b2 = linear(k2, 64, 64)
    w3, b3 = linear(k3, 64, 3)
    return (w1, b1, w2, b2, w3, b3)


def pack_params(params):
    """Pack all six tensors into one lane-dense (392, 128) f32 slab."""
    w1, b1, w2, b2, w3, b3 = params
    slab = jnp.zeros((PARAM_ROWS, FEAT_PAD), jnp.float32)
    slab = slab.at[0:11, 0:64].set(w1)                               # W1 (11,64)
    slab = slab.at[FEAT_PAD:FEAT_PAD + 64, 0:64].set(w2)             # W2 (64,64)
    slab = slab.at[2 * FEAT_PAD:2 * FEAT_PAD + 64, 0:3].set(w3)      # W3 (64,3)
    slab = slab.at[3 * FEAT_PAD + 0, 0:64].set(b1)                   # b1
    slab = slab.at[3 * FEAT_PAD + 1, 0:64].set(b2)                   # b2
    slab = slab.at[3 * FEAT_PAD + 2, 0:3].set(b3)                    # b3
    return slab


def qnetwork_ref(x, params):
    """Plain-JAX reference for correctness checking."""
    x = jnp.reshape(jnp.asarray(x, jnp.float32), (-1, 11))
    w1, b1, w2, b2, w3, b3 = params
    h1 = jnp.maximum(x @ w1 + b1, 0.0)
    h2 = jnp.maximum(h1 @ w2 + b2, 0.0)
    return h2 @ w3 + b3


if __name__ == "__main__":
    key = jax.random.PRNGKey(0)
    k_params, k_x1, k_xb = jax.random.split(key, 3)

    params = init_params(k_params)
    slab = pack_params(params)

    # 1) Exact module semantics: single sample, x.view(1, 11) -> (1, 3).
    x1 = jax.random.normal(k_x1, (11,), dtype=jnp.float32)
    out1 = jax.block_until_ready(qnetwork_forward(x1, slab))
    ref1 = qnetwork_ref(x1, params)
    assert out1.shape == (1, 3)
    assert jnp.allclose(out1, ref1, atol=1e-5, rtol=1e-5)

    # 2) Batched throughput path: 256 rows -> two 128-row grid steps,
    #    weights stay VMEM-resident across the "parallel" grid.
    xb = jax.random.normal(k_xb, (256, 11), dtype=jnp.float32)
    outb = jax.block_until_ready(qnetwork_forward_batched(xb, slab))
    refb = qnetwork_ref(xb, params)
    assert outb.shape == (256, 3)
    assert jnp.allclose(outb, refb, atol=1e-4, rtol=1e-4)

    print("KERNEL_OK")
</pallas_src>

<mosaic_0001>
module attributes {stable_mosaic.version = 11 : i64} {
  func.func @qnetwork_kernel(%arg0: i32, %arg1: memref<8x128xf32, #tpu.memory_space<vmem>>, %arg2: memref<392x128xf32, #tpu.memory_space<vmem>>, %arg3: memref<8x128xf32, #tpu.memory_space<vmem>>) attributes {dimension_semantics = [#tpu.dimension_semantics<parallel>], iteration_bounds = array<i64: 1>, scalar_prefetch = 0 : i64, scratch_operands = 0 : i64, tpu.core_type = #tpu.core_type<tc>, window_params = [{transform_indices = @transform_0, window_bounds = array<i64: 8, 128>}, {pipeline_mode = #tpu.pipeline_mode<synchronous>, transform_indices = @transform_1, window_bounds = array<i64: 392, 128>}, {transform_indices = @transform_2, window_bounds = array<i64: 8, 128>}]} {
    %c0 = arith.constant 0 : index
    %c0_0 = arith.constant 0 : index
    %0 = vector.load %arg1[%c0, %c0_0] : memref<8x128xf32, #tpu.memory_space<vmem>>, vector<8x128xf32>
    %c0_1 = arith.constant 0 : index
    %c0_2 = arith.constant 0 : index
    %1 = vector.load %arg2[%c0_1, %c0_2] : memref<392x128xf32, #tpu.memory_space<vmem>>, vector<128x128xf32>
    %c128 = arith.constant 128 : index
    %c0_3 = arith.constant 0 : index
    %2 = vector.load %arg2[%c128, %c0_3] : memref<392x128xf32, #tpu.memory_space<vmem>>, vector<128x128xf32>
    %c256 = arith.constant 256 : index
    %c0_4 = arith.constant 0 : index
    %3 = vector.load %arg2[%c256, %c0_4] : memref<392x128xf32, #tpu.memory_space<vmem>>, vector<128x128xf32>
    %c384 = arith.constant 384 : index
    %c0_5 = arith.constant 0 : index
    %4 = vector.load %arg2[%c384, %c0_5] : memref<392x128xf32, #tpu.memory_space<vmem>>, vector<8x128xf32>
    %5 = vector.extract_strided_slice %4 {offsets = [0, 0], sizes = [1, 128], strides = [1, 1]} : vector<8x128xf32> to vector<1x128xf32>
    %6 = vector.extract_strided_slice %4 {offsets = [1, 0], sizes = [1, 128], strides = [1, 1]} : vector<8x128xf32> to vector<1x128xf32>
    %7 = vector.extract_strided_slice %4 {offsets = [2, 0], sizes = [1, 128], strides = [1, 1]} : vector<8x128xf32> to vector<1x128xf32>
    %cst = arith.constant dense<0.000000e+00> : vector<8x128xf32>
    %8 = tpu.matmul %0, %1, %cst {dimension_numbers = #tpu.dot_dimension_numbers<[1], [0], [0], [1], [0, 0, 1, 1], [], []>} : vector<8x128xf32>, vector<128x128xf32>, vector<8x128xf32> -> vector<8x128xf32>
    %9 = vector.broadcast %5 : vector<1x128xf32> to vector<8x128xf32>
    %10 = arith.addf %8, %9 : vector<8x128xf32>
    %cst_6 = arith.constant 0.000000e+00 : f32
    %11 = vector.broadcast %cst_6 : f32 to vector<8x128xf32>
    %12 = arith.maximumf %10, %11 : vector<8x128xf32>
    %cst_7 = arith.constant dense<0.000000e+00> : vector<8x128xf32>
    %13 = tpu.matmul %12, %2, %cst_7 {dimension_numbers = #tpu.dot_dimension_numbers<[1], [0], [0], [1], [0, 0, 1, 1], [], []>} : vector<8x128xf32>, vector<128x128xf32>, vector<8x128xf32> -> vector<8x128xf32>
    %14 = vector.broadcast %6 : vector<1x128xf32> to vector<8x128xf32>
    %15 = arith.addf %13, %14 : vector<8x128xf32>
    %cst_8 = arith.constant 0.000000e+00 : f32
    %16 = vector.broadcast %cst_8 : f32 to vector<8x128xf32>
    %17 = arith.maximumf %15, %16 : vector<8x128xf32>
    %cst_9 = arith.constant dense<0.000000e+00> : vector<8x128xf32>
    %18 = tpu.matmul %17, %3, %cst_9 {dimension_numbers = #tpu.dot_dimension_numbers<[1], [0], [0], [1], [0, 0, 1, 1], [], []>} : vector<8x128xf32>, vector<128x128xf32>, vector<8x128xf32> -> vector<8x128xf32>
    %19 = vector.broadcast %7 : vector<1x128xf32> to vector<8x128xf32>
    %20 = arith.addf %18, %19 : vector<8x128xf32>
    %c0_10 = arith.constant 0 : index
    %c0_11 = arith.constant 0 : index
    %21 = vector.load %arg3[%c0_10, %c0_11] : memref<8x128xf32, #tpu.memory_space<vmem>>, vector<8x128xf32>
    tpu.vector_store %arg3[%c0_10, %c0_11], %20 {strides = array<i32>} : memref<8x128xf32, #tpu.memory_space<vmem>>, vector<8x128xf32>,
    return
  }
  func.func @transform_0(%arg0: i32) -> (i32, i32) {
    %c0_i32 = arith.constant 0 : i32
    %c0_i32_0 = arith.constant 0 : i32
    return %arg0, %c0_i32 : i32, i32
  }
  func.func @transform_1(%arg0: i32) -> (i32, i32) {
    %c0_i32 = arith.constant 0 : i32
    %c0_i32_0 = arith.constant 0 : i32
    %c0_i32_1 = arith.constant 0 : i32
    return %c0_i32, %c0_i32_0 : i32, i32
  }
  func.func @transform_2(%arg0: i32) -> (i32, i32) {
    %c0_i32 = arith.constant 0 : i32
    %c0_i32_0 = arith.constant 0 : i32
    return %arg0, %c0_i32 : i32, i32
  }
}

</mosaic_0001>

<llo_original>
// kernel: tpu_custom_call.1
$region0: #{tpu_custom_call.1}
  #allocation0 [shape = 'u32[]', space=smem, size = 0x4, offset = 0x4, fixed_abs, tag = 'smem constant byte address 0x4 - core index']
  #allocation1 [shape = 'u32[144,128]{1,0:T(1,128)}', space=vmem, size = 0x12000, scoped, tag = 'internal scratch']
  %s0 = inlined_call_operand.hbm [shape: f32[8,128], index: 0, kind: input, shape index: {}]
  %s1 = inlined_call_operand.hbm [shape: f32[392,128], index: 1, kind: input, shape index: {}]
  %s2 = inlined_call_operand.hbm [shape: f32[8,128], index: 2, kind: output, shape index: {}]
  %s3 = sld [smem:[#allocation0]]
  $region26: #{tpu_custom_call.1} parent=0
    _
  %s5 = ssub.s32 1, %s3
  %s6 = scalar_select 0, %s5, %s3
  $region1: #{tpu_custom_call.1} parent=0
    #allocation2 [shape = 'u8[4096]{0}', space=vmem, size = 0x1000, scoped, tag = 'input window, operand 0, single buffered']
    #allocation3 [shape = 's32[1]{0}', space=sflag, size = 0x4, scoped, tag = 'scoped memory for tpu_custom_call.1']
    #allocation4 [shape = 's32[1]{0}', space=sflag, size = 0x4, scoped, tag = 'scoped memory for tpu_custom_call.1']
    #allocation5 [shape = 'u8[200704]{0}', space=vmem, size = 0x31000, scoped, tag = 'input window, operand 1, single buffered']
    #allocation6 [shape = 's32[1]{0}', space=sflag, size = 0x4, scoped, tag = 'scoped memory for tpu_custom_call.1']
    #allocation7 [shape = 'u8[4096]{0}', space=vmem, size = 0x1000, scoped, tag = 'output window, operand 0, single buffered']
    %7 = vsyncpa [#allocation3], 0
    %8 = vsyncpa [#allocation6], 0
    %9 = vsyncpa [#allocation4], 0
    // Predicated region
    $region2: #{tpu_custom_call.1} parent=1 // pred_check
      _
    $region3: #{tpu_custom_call.1} parent=1 // pred_check_branch
      %11 = sbr.rel (0) target = $region5
    $region4: #{tpu_custom_call.1} parent=1 // pred_region
      %s13 = ssub.s32 128, 128
      %14 = vsyncadd [#allocation3], %s13
      %s16 = sshll.u32 [#allocation2], 4
      %s17 = int_to_ptr.vmem [resolvable:$true] %s16
      %19 = dma.hbm_to_vmem [thread:$0]  %s0, 128, %s17, [#allocation3]
    $region5: #{tpu_custom_call.1} parent=1 // pred_fallthru
      _
    // Predicated region
    $region6: #{tpu_custom_call.1} parent=1 // pred_check
      _
    $region7: #{tpu_custom_call.1} parent=1 // pred_check_branch
      %21 = sbr.rel (0) target = $region9
    $region8: #{tpu_custom_call.1} parent=1 // pred_region
      %s23 = ssub.s32 6272, 6272
      %24 = vsyncadd [#allocation6], %s23
      %s25 = sshll.u32 [#allocation5], 4
      %s26 = int_to_ptr.vmem [resolvable:$true] %s25
      %31 = dma.hbm_to_vmem [thread:$0]  %s1, 6272, %s26, [#allocation6], 128, 128, 8
    $region9: #{tpu_custom_call.1} parent=1 // pred_fallthru
      _
    // Predicated region
    $region10: #{tpu_custom_call.1} parent=1 // pred_check
      _
    $region11: #{tpu_custom_call.1} parent=1 // pred_check_branch
      %33 = sbr.rel (0) target = $region13
    $region12: #{tpu_custom_call.1} parent=1 // pred_region
      %34 = dma.done [#allocation3], 128
    $region13: #{tpu_custom_call.1} parent=1 // pred_fallthru
      _
    // Predicated region
    $region14: #{tpu_custom_call.1} parent=1 // pred_check
      _
    $region15: #{tpu_custom_call.1} parent=1 // pred_check_branch
      %36 = sbr.rel (0) target = $region17
    $region16: #{tpu_custom_call.1} parent=1 // pred_region
      %37 = dma.done [#allocation6], 6272
    $region17: #{tpu_custom_call.1} parent=1 // pred_fallthru
      _
    %v38 = vld [vmem:[#allocation2] sm:$0xff]
    %v39 = vld [vmem:[#allocation5] sm:$0xff]
    %v40 = vld [vmem:[#allocation5 + $0x8] sm:$0xff]
    %v41 = vld [vmem:[#allocation5 + $0x10] sm:$0xff]
    %v42 = vld [vmem:[#allocation5 + $0x18] sm:$0xff]
    %v43 = vld [vmem:[#allocation5 + $0x20] sm:$0xff]
    %v44 = vld [vmem:[#allocation5 + $0x28] sm:$0xff]
    %v45 = vld [vmem:[#allocation5 + $0x30] sm:$0xff]
    %v46 = vld [vmem:[#allocation5 + $0x38] sm:$0xff]
    %v47 = vld [vmem:[#allocation5 + $0x40] sm:$0xff]
    %v48 = vld [vmem:[#allocation5 + $0x48] sm:$0xff]
    %v49 = vld [vmem:[#allocation5 + $0x50] sm:$0xff]
    %v50 = vld [vmem:[#allocation5 + $0x58] sm:$0xff]
    %v51 = vld [vmem:[#allocation5 + $0x60] sm:$0xff]
    %v52 = vld [vmem:[#allocation5 + $0x68] sm:$0xff]
    %v53 = vld [vmem:[#allocation5 + $0x70] sm:$0xff]
    %v54 = vld [vmem:[#allocation5 + $0x78] sm:$0xff]
    %v55 = vld [vmem:[#allocation5 + $0x80] sm:$0xff]
    %v56 = vld [vmem:[#allocation5 + $0x88] sm:$0xff]
    %v57 = vld [vmem:[#allocation5 + $0x90] sm:$0xff]
    %v58 = vld [vmem:[#allocation5 + $0x98] sm:$0xff]
    %v59 = vld [vmem:[#allocation5 + $0xa0] sm:$0xff]
    %v60 = vld [vmem:[#allocation5 + $0xa8] sm:$0xff]
    %v61 = vld [vmem:[#allocation5 + $0xb0] sm:$0xff]
    %v62 = vld [vmem:[#allocation5 + $0xb8] sm:$0xff]
    %v63 = vld [vmem:[#allocation5 + $0xc0] sm:$0xff]
    %v64 = vld [vmem:[#allocation5 + $0xc8] sm:$0xff]
    %v65 = vld [vmem:[#allocation5 + $0xd0] sm:$0xff]
    %v66 = vld [vmem:[#allocation5 + $0xd8] sm:$0xff]
    %v67 = vld [vmem:[#allocation5 + $0xe0] sm:$0xff]
    %v68 = vld [vmem:[#allocation5 + $0xe8] sm:$0xff]
    %v69 = vld [vmem:[#allocation5 + $0xf0] sm:$0xff]
    %v70 = vld [vmem:[#allocation5 + $0xf8] sm:$0xff]
    %v71 = vld [vmem:[#allocation5 + $0x100] sm:$0xff]
    %v72 = vld [vmem:[#allocation5 + $0x108] sm:$0xff]
    %v73 = vld [vmem:[#allocation5 + $0x110] sm:$0xff]
    %v74 = vld [vmem:[#allocation5 + $0x118] sm:$0xff]
    %v75 = vld [vmem:[#allocation5 + $0x120] sm:$0xff]
    %v76 = vld [vmem:[#allocation5 + $0x128] sm:$0xff]
    %v77 = vld [vmem:[#allocation5 + $0x130] sm:$0xff]
    %v78 = vld [vmem:[#allocation5 + $0x138] sm:$0xff]
    %v79 = vld [vmem:[#allocation5 + $0x140] sm:$0xff]
    %v80 = vld [vmem:[#allocation5 + $0x148] sm:$0xff]
    %v81 = vld [vmem:[#allocation5 + $0x150] sm:$0xff]
    %v82 = vld [vmem:[#allocation5 + $0x158] sm:$0xff]
    %v83 = vld [vmem:[#allocation5 + $0x160] sm:$0xff]
    %v84 = vld [vmem:[#allocation5 + $0x168] sm:$0xff]
    %v85 = vld [vmem:[#allocation5 + $0x170] sm:$0xff]
    %v86 = vld [vmem:[#allocation5 + $0x178] sm:$0xff]
    %v87 = vld [vmem:[#allocation5 + $0x180] sm:$0xff]
    %v88 = vlaneseq
    %v89 = vshrl.u32 %v88, 7
    %v90 = vsub.s32 0, %v89
    %v91 = vrot.slane %v87, %v90
    %92 = vmatprep.subr.mxu0 0.0
    %93 = vmatpush1.msra.mxu0 %v39
    %94 = vmatprep.subr.mxu0 0.0
    %95 = vmatpush1.msra.mxu0 %v40
    %96 = vmatprep.subr.mxu0 0.0
    %97 = vmatpush1.msra.mxu0 %v41
    %98 = vmatprep.subr.mxu0 0.0
    %99 = vmatpush1.msra.mxu0 %v42
    %100 = vmatprep.subr.mxu0 0.0
    %101 = vmatpush1.msra.mxu0 %v43
    %102 = vmatprep.subr.mxu0 0.0
    %103 = vmatpush1.msra.mxu0 %v44
    %104 = vmatprep.subr.mxu0 0.0
    %105 = vmatpush1.msra.mxu0 %v45
    %106 = vmatprep.subr.mxu0 0.0
    %107 = vmatpush1.msra.mxu0 %v46
    %108 = vmatprep.subr.mxu0 0.0
    %109 = vmatpush1.msra.mxu0 %v47
    %110 = vmatprep.subr.mxu0 0.0
    %111 = vmatpush1.msra.mxu0 %v48
    %112 = vmatprep.subr.mxu0 0.0
    %113 = vmatpush1.msra.mxu0 %v49
    %114 = vmatprep.subr.mxu0 0.0
    %115 = vmatpush1.msra.mxu0 %v50
    %116 = vmatprep.subr.mxu0 0.0
    %117 = vmatpush1.msra.mxu0 %v51
    %118 = vmatprep.subr.mxu0 0.0
    %119 = vmatpush1.msra.mxu0 %v52
    %120 = vmatprep.subr.mxu0 0.0
    %121 = vmatpush1.msra.mxu0 %v53
    %122 = vmatprep.subr.mxu0 0.0
    %123 = vmatpush1.msra.mxu0 %v54
    %124 = vmatprep.subr.mxu0 0.0
    %125 = vmatpush1.msra.mxu0 0.0
    %126 = vmatprep.subr.mxu0 0.0
    %127 = vmatpush1.msra.mxu0 0.0
    %128 = vmatprep.subr.mxu0 0.0
    %129 = vmatpush1.msra.mxu0 0.0
    %130 = vmatprep.subr.mxu0 0.0
    %131 = vmatpush1.msra.mxu0 0.0
    %132 = vmatprep.subr.mxu0 0.0
    %133 = vmatpush1.msra.mxu0 0.0
    %134 = vmatprep.subr.mxu0 0.0
    %135 = vmatpush1.msra.mxu0 0.0
    %136 = vmatprep.subr.mxu0 0.0
    %137 = vmatpush1.msra.mxu0 0.0
    %138 = vmatprep.subr.mxu0 0.0
    %139 = vmatpush1.msra.mxu0 0.0
    %140 = vmatprep.subr.mxu0 0.0
    %141 = vmatpush1.msra.mxu0 0.0
    %142 = vmatprep.subr.mxu0 0.0
    %143 = vmatpush1.msra.mxu0 0.0
    %144 = vmatprep.subr.mxu0 0.0
    %145 = vmatpush1.msra.mxu0 0.0
    %146 = vmatprep.subr.mxu0 0.0
    %147 = vmatpush1.msra.mxu0 0.0
    %148 = vmatprep.subr.mxu0 0.0
    %149 = vmatpush1.msra.mxu0 0.0
    %150 = vmatprep.subr.mxu0 0.0
    %151 = vmatpush1.msra.mxu0 0.0
    %152 = vmatprep.subr.mxu0 0.0
    %153 = vmatpush1.msra.mxu0 0.0
    %154 = vmatprep.subr.mxu0 0.0
    %155 = vmatpush1.msra.mxu0 0.0
    %156 = vmatprep.mubr.f32.mxu0 0.0
    %157 = vmatmul.mubr.f32.gmra.mrb[0].mxu0 %v38
    %v158 = vpop.f32.mrb[0].mxu0
    %v159 = vadd.f32 %v91, %v158
    %v160 = vpop.f32.mrb[0].mxu0
    %161 = vdwg.mxu0
    %v162 = vmax.f32 %v159, 0.0
    %v163 = vlaneseq
    %v164 = vshrl.u32 %v163, 7
    %v165 = vsub.s32 1, %v164
    %v166 = vrot.slane %v87, %v165
    %167 = vmatprep.subr.mxu0 0.0
    %168 = vmatpush1.msra.mxu0 %v55
    %169 = vmatprep.subr.mxu0 0.0
    %170 = vmatpush1.msra.mxu0 %v56
    %171 = vmatprep.subr.mxu0 0.0
    %172 = vmatpush1.msra.mxu0 %v57
    %173 = vmatprep.subr.mxu0 0.0
    %174 = vmatpush1.msra.mxu0 %v58
    %175 = vmatprep.subr.mxu0 0.0
    %176 = vmatpush1.msra.mxu0 %v59
    %177 = vmatprep.subr.mxu0 0.0
    %178 = vmatpush1.msra.mxu0 %v60
    %179 = vmatprep.subr.mxu0 0.0
    %180 = vmatpush1.msra.mxu0 %v61
    %181 = vmatprep.subr.mxu0 0.0
    %182 = vmatpush1.msra.mxu0 %v62
    %183 = vmatprep.subr.mxu0 0.0
    %184 = vmatpush1.msra.mxu0 %v63
    %185 = vmatprep.subr.mxu0 0.0
    %186 = vmatpush1.msra.mxu0 %v64
    %187 = vmatprep.subr.mxu0 0.0
    %188 = vmatpush1.msra.mxu0 %v65
    %189 = vmatprep.subr.mxu0 0.0
    %190 = vmatpush1.msra.mxu0 %v66
    %191 = vmatprep.subr.mxu0 0.0
    %192 = vmatpush1.msra.mxu0 %v67
    %193 = vmatprep.subr.mxu0 0.0
    %194 = vmatpush1.msra.mxu0 %v68
    %195 = vmatprep.subr.mxu0 0.0
    %196 = vmatpush1.msra.mxu0 %v69
    %197 = vmatprep.subr.mxu0 0.0
    %198 = vmatpush1.msra.mxu0 %v70
    %199 = vmatprep.subr.mxu0 0.0
    %200 = vmatpush1.msra.mxu0 0.0
    %201 = vmatprep.subr.mxu0 0.0
    %202 = vmatpush1.msra.mxu0 0.0
    %203 = vmatprep.subr.mxu0 0.0
    %204 = vmatpush1.msra.mxu0 0.0
    %205 = vmatprep.subr.mxu0 0.0
    %206 = vmatpush1.msra.mxu0 0.0
    %207 = vmatprep.subr.mxu0 0.0
    %208 = vmatpush1.msra.mxu0 0.0
    %209 = vmatprep.subr.mxu0 0.0
    %210 = vmatpush1.msra.mxu0 0.0
    %211 = vmatprep.subr.mxu0 0.0
    %212 = vmatpush1.msra.mxu0 0.0
    %213 = vmatprep.subr.mxu0 0.0
    %214 = vmatpush1.msra.mxu0 0.0
    %215 = vmatprep.subr.mxu0 0.0
    %216 = vmatpush1.msra.mxu0 0.0
    %217 = vmatprep.subr.mxu0 0.0
    %218 = vmatpush1.msra.mxu0 0.0
    %219 = vmatprep.subr.mxu0 0.0
    %220 = vmatpush1.msra.mxu0 0.0
    %221 = vmatprep.subr.mxu0 0.0
    %222 = vmatpush1.msra.mxu0 0.0
    %223 = vmatprep.subr.mxu0 0.0
    %224 = vmatpush1.msra.mxu0 0.0
    %225 = vmatprep.subr.mxu0 0.0
    %226 = vmatpush1.msra.mxu0 0.0
    %227 = vmatprep.subr.mxu0 0.0
    %228 = vmatpush1.msra.mxu0 0.0
    %229 = vmatprep.subr.mxu0 0.0
    %230 = vmatpush1.msra.mxu0 0.0
    %231 = vmatprep.mubr.f32.mxu0 0.0
    %232 = vmatmul.mubr.f32.gmra.mrb[0].mxu0 %v162
    %v233 = vpop.f32.mrb[0].mxu0
    %v234 = vadd.f32 %v166, %v233
    %v235 = vpop.f32.mrb[0].mxu0
    %236 = vdwg.mxu0
    %v237 = vmax.f32 %v234, 0.0
    %v238 = vlaneseq
    %v239 = vshrl.u32 %v238, 7
    %v240 = vsub.s32 2, %v239
    %v241 = vrot.slane %v87, %v240
    %242 = vmatprep.subr.mxu0 0.0
    %243 = vmatpush1.msra.mxu0 %v71
    %244 = vmatprep.subr.mxu0 0.0
    %245 = vmatpush1.msra.mxu0 %v72
    %246 = vmatprep.subr.mxu0 0.0
    %247 = vmatpush1.msra.mxu0 %v73
    %248 = vmatprep.subr.mxu0 0.0
    %249 = vmatpush1.msra.mxu0 %v74
    %250 = vmatprep.subr.mxu0 0.0
    %251 = vmatpush1.msra.mxu0 %v75
    %252 = vmatprep.subr.mxu0 0.0
    %253 = vmatpush1.msra.mxu0 %v76
    %254 = vmatprep.subr.mxu0 0.0
    %255 = vmatpush1.msra.mxu0 %v77
    %256 = vmatprep.subr.mxu0 0.0
    %257 = vmatpush1.msra.mxu0 %v78
    %258 = vmatprep.subr.mxu0 0.0
    %259 = vmatpush1.msra.mxu0 %v79
    %260 = vmatprep.subr.mxu0 0.0
    %261 = vmatpush1.msra.mxu0 %v80
    %262 = vmatprep.subr.mxu0 0.0
    %263 = vmatpush1.msra.mxu0 %v81
    %264 = vmatprep.subr.mxu0 0.0
    %265 = vmatpush1.msra.mxu0 %v82
    %266 = vmatprep.subr.mxu0 0.0
    %267 = vmatpush1.msra.mxu0 %v83
    %268 = vmatprep.subr.mxu0 0.0
    %269 = vmatpush1.msra.mxu0 %v84
    %270 = vmatprep.subr.mxu0 0.0
    %271 = vmatpush1.msra.mxu0 %v85
    %272 = vmatprep.subr.mxu0 0.0
    %273 = vmatpush1.msra.mxu0 %v86
    %274 = vmatprep.subr.mxu0 0.0
    %275 = vmatpush1.msra.mxu0 0.0
    %276 = vmatprep.subr.mxu0 0.0
    %277 = vmatpush1.msra.mxu0 0.0
    %278 = vmatprep.subr.mxu0 0.0
    %279 = vmatpush1.msra.mxu0 0.0
    %280 = vmatprep.subr.mxu0 0.0
    %281 = vmatpush1.msra.mxu0 0.0
    %282 = vmatprep.subr.mxu0 0.0
    %283 = vmatpush1.msra.mxu0 0.0
    %284 = vmatprep.subr.mxu0 0.0
    %285 = vmatpush1.msra.mxu0 0.0
    %286 = vmatprep.subr.mxu0 0.0
    %287 = vmatpush1.msra.mxu0 0.0
    %288 = vmatprep.subr.mxu0 0.0
    %289 = vmatpush1.msra.mxu0 0.0
    %290 = vmatprep.subr.mxu0 0.0
    %291 = vmatpush1.msra.mxu0 0.0
    %292 = vmatprep.subr.mxu0 0.0
    %293 = vmatpush1.msra.mxu0 0.0
    %294 = vmatprep.subr.mxu0 0.0
    %295 = vmatpush1.msra.mxu0 0.0
    %296 = vmatprep.subr.mxu0 0.0
    %297 = vmatpush1.msra.mxu0 0.0
    %298 = vmatprep.subr.mxu0 0.0
    %299 = vmatpush1.msra.mxu0 0.0
    %300 = vmatprep.subr.mxu0 0.0
    %301 = vmatpush1.msra.mxu0 0.0
    %302 = vmatprep.subr.mxu0 0.0
    %303 = vmatpush1.msra.mxu0 0.0
    %304 = vmatprep.subr.mxu0 0.0
    %305 = vmatpush1.msra.mxu0 0.0
    %306 = vmatprep.mubr.f32.mxu0 0.0
    %307 = vmatmul.mubr.f32.gmra.mrb[0].mxu0 %v237
    %v308 = vpop.f32.mrb[0].mxu0
    %v309 = vadd.f32 %v241, %v308
    %v310 = vpop.f32.mrb[0].mxu0
    %311 = vdwg.mxu0
    %312 = vst [vmem:[#allocation7] sm:$0xff] %v309
    // Predicated region
    $region18: #{tpu_custom_call.1} parent=1 // pred_check
      _
    $region19: #{tpu_custom_call.1} parent=1 // pred_check_branch
      %314 = sbr.rel (0) target = $region21
    $region20: #{tpu_custom_call.1} parent=1 // pred_region
      %s316 = ssub.s32 128, 128
      %317 = vsyncadd [#allocation4], %s316
      %s319 = sshll.u32 [#allocation7], 4
      %s320 = int_to_ptr.vmem [resolvable:$true] %s319
      %322 = dma.vmem_to_hbm [thread:$0]  %s320, 128, %s2, [#allocation4]
    $region21: #{tpu_custom_call.1} parent=1 // pred_fallthru
      _
    // Predicated region
    $region22: #{tpu_custom_call.1} parent=1 // pred_check
      _
    $region23: #{tpu_custom_call.1} parent=1 // pred_check_branch
      %324 = sbr.rel (0) target = $region25
    $region24: #{tpu_custom_call.1} parent=1 // pred_region
      %325 = dma.done [#allocation4], 128
    $region25: #{tpu_custom_call.1} parent=1 // pred_fallthru
      _
    %326 = vsyncpa [#allocation3], 1
    %327 = vsyncpa [#allocation6], 1
    %328 = vsyncpa [#allocation4], 1

</llo_original>
